<compile_context>
chip_gen: v7x
topology: tpu7x:2x2x1
jax: 0.10.0
libtpu: 0.0.40
codegen_flags: <defaults>
</compile_context>

<pallas_src>
import functools

import numpy as np
import jax
import jax.numpy as jnp
from jax import lax
from jax.experimental import pallas as pl
from jax.experimental.pallas import tpu as pltpu


# --------------------------------------------------------------------------------------
# Host-side helpers (identical semantics to the PyTorch file)
# --------------------------------------------------------------------------------------
def map_phi(phi, code_sum):
    phi_index = np.zeros_like(code_sum)
    batch, length = np.shape(code_sum)
    if len(phi) < batch * length:
        for i in phi:
            phi_index[code_sum == i] = phi[i]
    else:
        for i in range(batch):
            for j in range(length):
                if phi.get(code_sum[i, j]) is not None:
                    phi_index[i, j] = phi[code_sum[i, j]]
                else:
                    phi_index[i, j] = 0
    return phi_index


def _softplus_np(x):
    # LogOnePlusExp: numerically-stable log(1 + exp(x))
    return np.maximum(x, 0.0) + np.log1p(np.exp(-np.abs(x)))


def reference_loss(inp, target, mask, depth, vocab2code, phi_list):
    """Pure-numpy mirror of the PyTorch forward (for validation)."""
    inp = np.asarray(inp, np.float32)
    B, L, _ = inp.shape
    target = np.asarray(target)[:, :L]
    mask = np.asarray(mask, np.float32)[:, :L]
    code = vocab2code[target, :].copy()
    code_sum = np.cumsum(code * np.power(2, np.arange(depth)), 2)
    loss = np.float32(0.0)
    mask_step = None
    for i in range(depth):
        if i == 0:
            phi_index = np.zeros((B, L), np.int64)
            mask_step = mask.copy()
        else:
            if np.sum(code[:, :, i] == -1) == B * L:
                break
            phi_index = map_phi(
                phi_list[i], code_sum[:, :, i - 1] * (code[:, :, i] >= 0)
            ).astype(np.int64)
            mask_step = (code[:, :, i] >= 0).astype(np.float32) * mask_step
        logit = np.take_along_axis(inp, phi_index[..., None], axis=2)[..., 0]
        loss -= np.sum(
            (logit * code[:, :, i].astype(np.float32) - _softplus_np(logit)) * mask_step
        )
    return loss / mask.sum()


# --------------------------------------------------------------------------------------
# Architecture query (1 TensorCore on v5e/v6e, 2 on v7x)
# --------------------------------------------------------------------------------------
_NUM_TC_CACHE = None


def _num_tensorcores():
    global _NUM_TC_CACHE
    if _NUM_TC_CACHE is None:
        try:
            kind = jax.devices()[0].device_kind.lower()
        except Exception:
            kind = ""
        _NUM_TC_CACHE = 2 if ("v7" in kind or "7x" in kind) else 1
    return _NUM_TC_CACHE


# --------------------------------------------------------------------------------------
# Pallas kernel: fused masked binary-CE + global sum reduction (flat (R, 128) layout)
# --------------------------------------------------------------------------------------
_CHUNK_R = 32     # rows per inner chunk  (32 x 128 f32 = 4 vregs / plane)
_NCARRY = 4       # independent partial-sum accumulators (break the vadd dependency chain)
_MAX_TILE_R = 4096  # rows per grid block (2 MiB f32 logit block; multiple of _CHUNK_R)


def _binary_ce_sum_kernel(logit_ref, code_ref, ms_ref, acc_ref):
    # logit_ref: (tile_r, 128) f32        flattened (row, depth) stream
    # code_ref : (tile_r, 128) i8 (or f32)
    # ms_ref   : (tile_r, 128) i8 (or f32)
    # acc_ref  : (1, 8, 128)   f32        per-split resident partial-sum accumulator
    step = pl.program_id(1)

    @pl.when(step == 0)
    def _init():
        acc_ref[...] = jnp.zeros_like(acc_ref)

    tile_r = logit_ref.shape[0]
    n_chunks = tile_r // _CHUNK_R

    def body(c, carries):
        off = pl.multiple_of(c * _CHUNK_R, _CHUNK_R)
        lg = logit_ref[pl.ds(off, _CHUNK_R), :]
        cd = code_ref[pl.ds(off, _CHUNK_R), :].astype(jnp.float32)   # VPU upcast from i8
        ms = ms_ref[pl.ds(off, _CHUNK_R), :].astype(jnp.float32)
        # numerically-stable softplus == LogOnePlusExp in the reference module
        sp = jnp.maximum(lg, 0.0) + jnp.log1p(jnp.exp(-jnp.abs(lg)))
        term = (lg * cd - sp) * ms                                   # (_CHUNK_R, 128)
        carries = list(carries)
        for j in range(_CHUNK_R // 8):                               # one (8,128) vreg slab each
            carries[j % _NCARRY] = carries[j % _NCARRY] + term[j * 8:(j + 1) * 8, :]
        return tuple(carries)

    init = tuple(jnp.zeros((8, 128), jnp.float32) for _ in range(_NCARRY))
    carries = lax.fori_loop(0, n_chunks, body, init, unroll=min(8, n_chunks))
    total = carries[0]
    for k in range(1, _NCARRY):
        total = total + carries[k]
    acc_ref[...] = acc_ref[...] + total[None]


@functools.partial(jax.jit, static_argnames=("num_splits", "tile_r", "tiles_per_split"))
def _binary_ce_loss(inp_flat, idx, code, ms, mask_sum, *, num_splits, tile_r, tiles_per_split):
    """inp_flat (N,P) f32, idx (N,D) i32, code/ms (N,D) i8-or-f32, mask_sum scalar."""
    n, _ = inp_flat.shape
    depth = idx.shape[1]

    # Hoisted per-depth logit gather (kernel then streams only N*D*(4+1+1) bytes).
    logit = jnp.take_along_axis(inp_flat, idx, axis=1)               # (N, D) f32

    total_rows = num_splits * tiles_per_split * tile_r
    pad = total_rows * 128 - n * depth
    # Only a small tail pad; mask_step==0 there guarantees zero contribution. Fused under jit.
    lg = jnp.pad(jnp.ravel(logit), (0, pad)).reshape(total_rows, 128)
    cd = jnp.pad(jnp.ravel(code), (0, pad)).reshape(total_rows, 128)
    msp = jnp.pad(jnp.ravel(ms), (0, pad)).reshape(total_rows, 128)

    row_map = lambda s, i: (s * tiles_per_split + i, 0)
    acc = pl.pallas_call(
        _binary_ce_sum_kernel,
        out_shape=jax.ShapeDtypeStruct((num_splits, 8, 128), jnp.float32),
        grid_spec=pltpu.PrefetchScalarGridSpec(
            num_scalar_prefetch=0,
            grid=(num_splits, tiles_per_split),
            in_specs=[
                pl.BlockSpec((tile_r, 128), row_map),
                pl.BlockSpec((tile_r, 128), row_map),
                pl.BlockSpec((tile_r, 128), row_map),
            ],
            out_specs=pl.BlockSpec((1, 8, 128), lambda s, i: (s, 0, 0)),
        ),
        compiler_params=pltpu.CompilerParams(
            dimension_semantics=("parallel", "arbitrary"),
            vmem_limit_bytes=32 * 1024 * 1024,
        ),
    )(lg, cd, msp)

    # Final tiny collapse (num_splits * 8 * 128 elements) done in XLA, fused in the same jit.
    return -jnp.sum(acc) / mask_sum


# --------------------------------------------------------------------------------------
# Module-equivalent wrapper (host glue: truncation, code lookup, dict mapping, tiling choice)
# --------------------------------------------------------------------------------------
def _round_up(x, m):
    return ((x + m - 1) // m) * m


def language_model_criterion_binary(inp, target, mask, depth, vocab2code, phi_list,
                                    cluster_size=None):
    inp = jnp.asarray(inp, jnp.float32)
    b, l, p = inp.shape
    target_np = np.asarray(target)[:, :l]
    mask_np = np.asarray(mask, np.float32)[:, :l]

    code = vocab2code[target_np, :].copy()                                  # (B, L, depth)
    code_sum = np.cumsum(code * np.power(2, np.arange(depth)), 2)

    # Host-side construction of per-depth gather indices and cumulative step masks.
    # TODO(synk): dict-based map_phi has no device equivalent -- stays as numpy, same as original.
    eff_depth = depth
    phi_index = np.zeros((b, l, depth), np.int32)
    mask_step = np.zeros((b, l, depth), np.float32)
    cur = mask_np.copy()
    mask_step[:, :, 0] = cur
    for i in range(1, depth):
        if np.sum(code[:, :, i] == -1) == b * l:
            eff_depth = i      # remaining levels contribute exactly zero -> drop them entirely
            break
        phi_index[:, :, i] = map_phi(
            phi_list[i], code_sum[:, :, i - 1] * (code[:, :, i] >= 0)
        ).astype(np.int32)
        cur = (code[:, :, i] >= 0).astype(np.float32) * cur
        mask_step[:, :, i] = cur

    n = b * l
    code_flat = code[:, :, :eff_depth].reshape(n, eff_depth)
    phi_flat = phi_index[:, :, :eff_depth].reshape(n, eff_depth)
    ms_flat = mask_step[:, :, :eff_depth].reshape(n, eff_depth)

    # Narrow side planes (per perf review). code values {-1,0,1} fit signed int8 exactly;
    # the -1 entries are always cancelled by mask_step==0, just like in the reference.
    if code_flat.min() >= -128 and code_flat.max() <= 127:
        code_arr = code_flat.astype(np.int8)
    else:
        code_arr = code_flat.astype(np.float32)
    if np.all((ms_flat == 0.0) | (ms_flat == 1.0)):
        ms_arr = ms_flat.astype(np.int8)
    else:
        ms_arr = ms_flat.astype(np.float32)        # fractional mask -> keep exact f32 semantics

    # Tile sizing: flat (rows, 128) layout, rows a multiple of _CHUNK_R; split across TCs on v7x.
    num_splits = _num_tensorcores()
    total_rows_needed = max(pl.cdiv(n * eff_depth, 128), 1)
    rows_per_split = pl.cdiv(total_rows_needed, num_splits)
    tile_r = min(_round_up(rows_per_split, _CHUNK_R), _MAX_TILE_R)
    tiles_per_split = pl.cdiv(total_rows_needed, num_splits * tile_r)

    loss = _binary_ce_loss(
        inp.reshape(n, p),
        jnp.asarray(phi_flat, jnp.int32),
        jnp.asarray(code_arr),
        jnp.asarray(ms_arr),
        jnp.asarray(mask_np.sum(), jnp.float32),
        num_splits=num_splits,
        tile_r=tile_r,
        tiles_per_split=tiles_per_split,
    )
    return loss


# --------------------------------------------------------------------------------------
# Demo / self-check
# --------------------------------------------------------------------------------------
if __name__ == "__main__":
    key = jax.random.PRNGKey(0)
    k_in, k_tgt = jax.random.split(key)

    B, L, depth, vocab = 2, 8, 4, 16
    num_phi = (1 << depth) - 1  # internal nodes of a depth-4 binary tree = 15

    # Deterministic synthetic binary-code table: bit d of token v; tokens 12..15 have
    # truncated (depth-2) codes marked with -1, exercising the mask_step logic.
    vocab2code = np.zeros((vocab, depth), np.int64)
    for v in range(vocab):
        for d in range(depth):
            vocab2code[v, d] = (v >> d) & 1
    vocab2code[12:, 2:] = -1

    # phi_list[i]: prefix code_sum at level i-1 -> internal-node (logit column) index.
    phi_list = [dict()] + [
        {c: (1 << i) - 1 + c for c in range(1 << i)} for i in range(1, depth)
    ]
    cluster_size = 2

    inp = jax.random.normal(k_in, (B, L, num_phi), dtype=jnp.float32)
    target = jax.random.randint(k_tgt, (B, L + 2), 0, vocab, dtype=jnp.int32)
    lengths = np.array([L, L - 3])
    mask = (np.arange(L + 2)[None, :] < lengths[:, None]).astype(np.float32)

    loss = language_model_criterion_binary(
        inp, np.asarray(target), mask, depth, vocab2code, phi_list, cluster_size
    )
    loss = jax.block_until_ready(loss)

    ref = reference_loss(np.asarray(inp), np.asarray(target), mask, depth,
                         vocab2code, phi_list)
    assert abs(float(loss) - float(ref)) <= 1e-3 * max(1.0, abs(float(ref))), (
        float(loss), float(ref))

    print("KERNEL_OK")
</pallas_src>

<mosaic_0001>
module attributes {stable_mosaic.version = 11 : i64} {
  func.func @_binary_ce_sum_kernel(%arg0: i32, %arg1: i32, %arg2: memref<32x128xf32, #tpu.memory_space<vmem>>, %arg3: memref<32x128xi8, #tpu.memory_space<vmem>>, %arg4: memref<32x128xi8, #tpu.memory_space<vmem>>, %arg5: memref<1x8x128xf32, #tpu.memory_space<vmem>>) attributes {dimension_semantics = [#tpu.dimension_semantics<parallel>, #tpu.dimension_semantics<arbitrary>], iteration_bounds = array<i64: 1, 1>, scalar_prefetch = 0 : i64, scratch_operands = 0 : i64, tpu.core_type = #tpu.core_type<tc>, window_params = [{transform_indices = @transform_0, window_bounds = array<i64: 32, 128>}, {transform_indices = @transform_1, window_bounds = array<i64: 32, 128>}, {transform_indices = @transform_2, window_bounds = array<i64: 32, 128>}, {transform_indices = @transform_3, window_bounds = array<i64: 1, 8, 128>}]} {
    %c0_i32 = arith.constant 0 : i32
    %0 = arith.cmpi eq, %arg1, %c0_i32 : i32
    %1 = arith.extui %0 : i1 to i32
    %c0_i32_0 = arith.constant 0 : i32
    %2 = arith.cmpi ne, %1, %c0_i32_0 : i32
    scf.if %2 {
      %cst_15 = arith.constant 0.000000e+00 : f32
      %43 = vector.broadcast %cst_15 : f32 to vector<1x8x128xf32>
      %c0_16 = arith.constant 0 : index
      %c0_17 = arith.constant 0 : index
      %c0_18 = arith.constant 0 : index
      %44 = vector.load %arg5[%c0_16, %c0_17, %c0_18] : memref<1x8x128xf32, #tpu.memory_space<vmem>>, vector<1x8x128xf32>
      tpu.vector_store %arg5[%c0_16, %c0_17, %c0_18], %43 {strides = array<i32>} : memref<1x8x128xf32, #tpu.memory_space<vmem>>, vector<1x8x128xf32>,
    } else {
    }
    %cst = arith.constant 0.000000e+00 : f32
    %3 = vector.broadcast %cst : f32 to vector<8x128xf32>
    %cst_1 = arith.constant 0.000000e+00 : f32
    %4 = vector.broadcast %cst_1 : f32 to vector<8x128xf32>
    %cst_2 = arith.constant 0.000000e+00 : f32
    %5 = vector.broadcast %cst_2 : f32 to vector<8x128xf32>
    %cst_3 = arith.constant 0.000000e+00 : f32
    %6 = vector.broadcast %cst_3 : f32 to vector<8x128xf32>
    %c0_i32_4 = arith.constant 0 : i32
    %c32_i32 = arith.constant 32 : i32
    %7 = arith.muli %c0_i32_4, %c32_i32 : i32
    %8 = tpu.assume_multiple %7, 32 : i32
    %9 = arith.index_cast %8 : i32 to index
    %c0 = arith.constant 0 : index
    %10 = vector.load %arg2[%9, %c0] : memref<32x128xf32, #tpu.memory_space<vmem>>, vector<32x128xf32>
    %11 = arith.index_cast %8 : i32 to index
    %c0_5 = arith.constant 0 : index
    %12 = vector.load %arg3[%11, %c0_5] : memref<32x128xi8, #tpu.memory_space<vmem>>, vector<32x128xi8>
    %13 = arith.sitofp %12 : vector<32x128xi8> to vector<32x128xf32>
    %14 = arith.index_cast %8 : i32 to index
    %c0_6 = arith.constant 0 : index
    %15 = vector.load %arg4[%14, %c0_6] : memref<32x128xi8, #tpu.memory_space<vmem>>, vector<32x128xi8>
    %16 = arith.sitofp %15 : vector<32x128xi8> to vector<32x128xf32>
    %cst_7 = arith.constant 0.000000e+00 : f32
    %17 = vector.broadcast %cst_7 : f32 to vector<32x128xf32>
    %18 = arith.maximumf %10, %17 : vector<32x128xf32>
    %19 = math.absf %10 : vector<32x128xf32>
    %cst_8 = arith.constant 0.000000e+00 : f32
    %20 = vector.broadcast %cst_8 : f32 to vector<32x128xf32>
    %21 = arith.subf %20, %19 : vector<32x128xf32>
    %22 = math.exp %21 : vector<32x128xf32>
    %23 = math.log1p %22 : vector<32x128xf32>
    %24 = arith.addf %18, %23 : vector<32x128xf32>
    %25 = arith.mulf %10, %13 : vector<32x128xf32>
    %26 = arith.subf %25, %24 : vector<32x128xf32>
    %27 = arith.mulf %26, %16 : vector<32x128xf32>
    %28 = vector.extract_strided_slice %27 {offsets = [0, 0], sizes = [8, 128], strides = [1, 1]} : vector<32x128xf32> to vector<8x128xf32>
    %29 = arith.addf %3, %28 : vector<8x128xf32>
    %30 = vector.extract_strided_slice %27 {offsets = [8, 0], sizes = [8, 128], strides = [1, 1]} : vector<32x128xf32> to vector<8x128xf32>
    %31 = arith.addf %4, %30 : vector<8x128xf32>
    %32 = vector.extract_strided_slice %27 {offsets = [16, 0], sizes = [8, 128], strides = [1, 1]} : vector<32x128xf32> to vector<8x128xf32>
    %33 = arith.addf %5, %32 : vector<8x128xf32>
    %34 = vector.extract_strided_slice %27 {offsets = [24, 0], sizes = [8, 128], strides = [1, 1]} : vector<32x128xf32> to vector<8x128xf32>
    %35 = arith.addf %6, %34 : vector<8x128xf32>
    %c1_i32 = arith.constant 1 : i32
    %36 = arith.addf %29, %31 : vector<8x128xf32>
    %37 = arith.addf %36, %33 : vector<8x128xf32>
    %38 = arith.addf %37, %35 : vector<8x128xf32>
    %c0_9 = arith.constant 0 : index
    %c0_10 = arith.constant 0 : index
    %c0_11 = arith.constant 0 : index
    %39 = vector.load %arg5[%c0_9, %c0_10, %c0_11] : memref<1x8x128xf32, #tpu.memory_space<vmem>>, vector<1x8x128xf32>
    %40 = vector.shape_cast %38 : vector<8x128xf32> to vector<1x8x128xf32>
    %41 = arith.addf %39, %40 : vector<1x8x128xf32>
    %c0_12 = arith.constant 0 : index
    %c0_13 = arith.constant 0 : index
    %c0_14 = arith.constant 0 : index
    %42 = vector.load %arg5[%c0_12, %c0_13, %c0_14] : memref<1x8x128xf32, #tpu.memory_space<vmem>>, vector<1x8x128xf32>
    tpu.vector_store %arg5[%c0_12, %c0_13, %c0_14], %41 {strides = array<i32>} : memref<1x8x128xf32, #tpu.memory_space<vmem>>, vector<1x8x128xf32>,
    return
  }
  func.func @transform_0(%arg0: i32, %arg1: i32) -> (i32, i32) {
    %c1_i32 = arith.constant 1 : i32
    %0 = arith.muli %arg0, %c1_i32 : i32
    %1 = arith.addi %0, %arg1 : i32
    %c0_i32 = arith.constant 0 : i32
    %c0_i32_0 = arith.constant 0 : i32
    return %1, %c0_i32 : i32, i32
  }
  func.func @transform_1(%arg0: i32, %arg1: i32) -> (i32, i32) {
    %c1_i32 = arith.constant 1 : i32
    %0 = arith.muli %arg0, %c1_i32 : i32
    %1 = arith.addi %0, %arg1 : i32
    %c0_i32 = arith.constant 0 : i32
    %c0_i32_0 = arith.constant 0 : i32
    return %1, %c0_i32 : i32, i32
  }
  func.func @transform_2(%arg0: i32, %arg1: i32) -> (i32, i32) {
    %c1_i32 = arith.constant 1 : i32
    %0 = arith.muli %arg0, %c1_i32 : i32
    %1 = arith.addi %0, %arg1 : i32
    %c0_i32 = arith.constant 0 : i32
    %c0_i32_0 = arith.constant 0 : i32
    return %1, %c0_i32 : i32, i32
  }
  func.func @transform_3(%arg0: i32, %arg1: i32) -> (i32, i32, i32) {
    %c0_i32 = arith.constant 0 : i32
    %c0_i32_0 = arith.constant 0 : i32
    %c0_i32_1 = arith.constant 0 : i32
    return %arg0, %c0_i32, %c0_i32_0 : i32, i32, i32
  }
}

</mosaic_0001>

<llo_original>
// kernel: _binary_ce_loss.1
$region0: #{_binary_ce_loss.1}
  #allocation0 [shape = 'u32[]', space=smem, size = 0x4, offset = 0x4, fixed_abs, tag = 'smem constant byte address 0x4 - core index']
  #allocation1 [shape = 'u32[144,128]{1,0:T(1,128)}', space=vmem, size = 0x12000, scoped, tag = 'internal scratch']
  %s0 = inlined_call_operand.vmem [shape: f32[32,128], index: 0, kind: input, shape index: {}]
  %s1 = inlined_call_operand.vmem [shape: s8[32,128], index: 1, kind: input, shape index: {}]
  %s2 = inlined_call_operand.vmem [shape: s8[32,128], index: 2, kind: input, shape index: {}]
  %s3 = inlined_call_operand.vmem [shape: f32[1,8,128], index: 3, kind: output, shape index: {}]
  %s4 = sld [smem:[#allocation0]]
  $region26: #{_binary_ce_loss.1} parent=0
    _
  %s6 = ssub.s32 1, %s4
  %s7 = scalar_select 0, %s6, %s4
  // Predicated region
  $region2: #{_binary_ce_loss.1} parent=0 // pred_check
    _
  $region3: #{_binary_ce_loss.1} parent=0 // pred_check_branch
    %9 = sbr.rel (0) target = $region5
  $region4: #{_binary_ce_loss.1} parent=0 // pred_region
    %s10 = sadd.s32 0, 0
    %s11 = smul.u32 4, %s10
    %p12 = scmp.lt.s32.totalorder %s11, 3
    %s13 = scalar_select %p12, %s11, 3
    %s14 = smul.addr %s13, 8
    %s15 = scalar_lea.vmem %s0, %s14
    %s16 = sadd.s32 0, 0
    %s17 = smul.u32 4, %s16
  $region5: #{_binary_ce_loss.1} parent=0 // pred_fallthru
    _
  // Predicated region
  $region6: #{_binary_ce_loss.1} parent=0 // pred_check
    _
  $region7: #{_binary_ce_loss.1} parent=0 // pred_check_branch
    %19 = sbr.rel (0) target = $region9
  $region8: #{_binary_ce_loss.1} parent=0 // pred_region
    %s20 = sadd.s32 0, 0
    %p21 = scmp.lt.s32.totalorder %s20, 0
    %s22 = scalar_select %p21, %s20, 0
    %s23 = smul.addr %s22, 8
    %s24 = scalar_lea.vmem %s1, %s23
    %s25 = sadd.s32 0, 0
  $region9: #{_binary_ce_loss.1} parent=0 // pred_fallthru
    _
  // Predicated region
  $region10: #{_binary_ce_loss.1} parent=0 // pred_check
    _
  $region11: #{_binary_ce_loss.1} parent=0 // pred_check_branch
    %27 = sbr.rel (0) target = $region13
  $region12: #{_binary_ce_loss.1} parent=0 // pred_region
    %s28 = sadd.s32 0, 0
    %p29 = scmp.lt.s32.totalorder %s28, 0
    %s30 = scalar_select %p29, %s28, 0
    %s31 = smul.addr %s30, 8
    %s32 = scalar_lea.vmem %s2, %s31
    %s33 = sadd.s32 0, 0
  $region13: #{_binary_ce_loss.1} parent=0 // pred_fallthru
    _
  %s34 = sadd.s32 0, 0
  %s35 = smul.u32 4, %s34
  %p36 = scmp.lt.s32.totalorder %s35, 3
  %s37 = scalar_select %p36, %s35, 3
  %s38 = smul.addr %s37, 8
  %s39 = scalar_lea.vmem %s0, %s38
  %s40 = sadd.s32 0, 0
  %p41 = scmp.lt.s32.totalorder %s40, 0
  %s42 = scalar_select %p41, %s40, 0
  %s43 = smul.addr %s42, 8
  %s44 = scalar_lea.vmem %s1, %s43
  %s45 = sadd.s32 0, 0
  %p46 = scmp.lt.s32.totalorder %s45, 0
  %s47 = scalar_select %p46, %s45, 0
  %s48 = smul.addr %s47, 8
  %s49 = scalar_lea.vmem %s2, %s48
  %s50 = sadd.s32 0, 0
  %s51 = smul.u32 4, %s50
  %p52 = scmp.lt.s32.totalorder %s51, 3
  %s53 = scalar_select %p52, %s51, 3
  %s54 = smul.addr %s53, 8
  %s55 = scalar_lea.vmem %s0, %s54
  %s56 = sadd.s32 0, 0
  %s57 = smul.u32 4, %s56
  %s58 = sadd.s32 0, 0
  %p59 = scmp.lt.s32.totalorder %s58, 0
  %s60 = scalar_select %p59, %s58, 0
  %s61 = smul.addr %s60, 8
  %s62 = scalar_lea.vmem %s1, %s61
  %s63 = sadd.s32 0, 0
  %s64 = sadd.s32 0, 0
  %p65 = scmp.lt.s32.totalorder %s64, 0
  %s66 = scalar_select %p65, %s64, 0
  %s67 = smul.addr %s66, 8
  %s68 = scalar_lea.vmem %s2, %s67
  %s69 = sadd.s32 0, 0
  %p70 = scmp.eq.s32.totalorder 0, 0
  // Predicated region
  $region14: #{_binary_ce_loss.1} parent=0 // pred_check
    %p71 = pneg %p70
  $region15: #{_binary_ce_loss.1} parent=0 // pred_check_branch
    %73 = sbr.rel (%p71) target = $region17
  $region16: #{_binary_ce_loss.1} parent=0 // pred_region
    %74 = vst [vmem:[%s3] sm:$0xff] 0.0
  $region17: #{_binary_ce_loss.1} parent=0 // pred_fallthru
    _
  %v75 = vld [vmem:[%s55] sm:$0xff]
  %v76 = vld [vmem:[%s55 + $0x8] sm:$0xff]
  %v77 = vld [vmem:[%s55 + $0x10] sm:$0xff]
  %v78 = vld [vmem:[%s55 + $0x18] sm:$0xff]
  %v79 = vld [vmem:[%s62] sm:$0xff]
  %v80 = vunpack.c.0.s8 %v79
  %v81 = vunpack.c.1.s8 %v79
  %v82 = vunpack.c.2.s8 %v79
  %v83 = vunpack.c.3.s8 %v79
  %v84 = vcvt.s32.f32 %v80
  %v85 = vcvt.s32.f32 %v81
  %v86 = vcvt.s32.f32 %v82
  %v87 = vcvt.s32.f32 %v83
  %v88 = vld [vmem:[%s68] sm:$0xff]
  %v89 = vunpack.c.0.s8 %v88
  %v90 = vunpack.c.1.s8 %v88
  %v91 = vunpack.c.2.s8 %v88
  %v92 = vunpack.c.3.s8 %v88
  %v93 = vcvt.s32.f32 %v89
  %v94 = vcvt.s32.f32 %v90
  %v95 = vcvt.s32.f32 %v91
  %v96 = vcvt.s32.f32 %v92
  %v97 = vmax.f32 %v75, 0.0
  %v98 = vmax.f32 %v76, 0.0
  %v99 = vmax.f32 %v77, 0.0
  %v100 = vmax.f32 %v78, 0.0
  %v101 = vand.u32 2147483647, %v75
  %v102 = vand.u32 2147483647, %v76
  %v103 = vand.u32 2147483647, %v77
  %v104 = vand.u32 2147483647, %v78
  %v105 = vsub.f32 0.0, %v101
  %v106 = vsub.f32 0.0, %v102
  %v107 = vsub.f32 0.0, %v103
  %v108 = vsub.f32 0.0, %v104
  %v109 = vmul.f32 %v105, 1.442695
  %v110 = vpow.pop %v109
  %v111 = vmul.f32 %v106, 1.442695
  %v112 = vpow.pop %v111
  %v113 = vmul.f32 %v107, 1.442695
  %v114 = vpow.pop %v113
  %v115 = vmul.f32 %v108, 1.442695
  %v116 = vpow.pop %v115
  %v117 = vadd.f32 %v110, 1.0
  %v118 = vlog2.pop %v117
  %v119 = vmul.f32 %v118, 0.6931472
  %v120 = vmul.f32 -0.5, %v110
  %v121 = vadd.f32 %v120, 1.0
  %v122 = vmul.f32 %v121, %v110
  %v123 = vand.u32 2147483647, %v110
  %vm124 = vcmp.lt.f32.partialorder %v123, 0.0004427343
  %v125 = vsel %vm124, %v122, %v119
  %v126 = vadd.f32 %v112, 1.0
  %v127 = vlog2.pop %v126
  %v128 = vmul.f32 %v127, 0.6931472
  %v129 = vmul.f32 -0.5, %v112
  %v130 = vadd.f32 %v129, 1.0
  %v131 = vmul.f32 %v130, %v112
  %v132 = vand.u32 2147483647, %v112
  %vm133 = vcmp.lt.f32.partialorder %v132, 0.0004427343
  %v134 = vsel %vm133, %v131, %v128
  %v135 = vadd.f32 %v114, 1.0
  %v136 = vlog2.pop %v135
  %v137 = vmul.f32 %v136, 0.6931472
  %v138 = vmul.f32 -0.5, %v114
  %v139 = vadd.f32 %v138, 1.0
  %v140 = vmul.f32 %v139, %v114
  %v141 = vand.u32 2147483647, %v114
  %vm142 = vcmp.lt.f32.partialorder %v141, 0.0004427343
  %v143 = vsel %vm142, %v140, %v137
  %v144 = vadd.f32 %v116, 1.0
  %v145 = vlog2.pop %v144
  %v146 = vmul.f32 %v145, 0.6931472
  %v147 = vmul.f32 -0.5, %v116
  %v148 = vadd.f32 %v147, 1.0
  %v149 = vmul.f32 %v148, %v116
  %v150 = vand.u32 2147483647, %v116
  %vm151 = vcmp.lt.f32.partialorder %v150, 0.0004427343
  %v152 = vsel %vm151, %v149, %v146
  %v153 = vadd.f32 %v97, %v125
  %v154 = vadd.f32 %v98, %v134
  %v155 = vadd.f32 %v99, %v143
  %v156 = vadd.f32 %v100, %v152
  %v157 = vmul.f32 %v75, %v84
  %v158 = vmul.f32 %v76, %v85
  %v159 = vmul.f32 %v77, %v86
  %v160 = vmul.f32 %v78, %v87
  %v161 = vsub.f32 %v157, %v153
  %v162 = vsub.f32 %v158, %v154
  %v163 = vsub.f32 %v159, %v155
  %v164 = vsub.f32 %v160, %v156
  %v165 = vmul.f32 %v161, %v93
  %v166 = vmul.f32 %v162, %v94
  %v167 = vmul.f32 %v163, %v95
  %v168 = vmul.f32 %v164, %v96
  %v169 = vadd.f32 %v165, 0.0
  %v170 = vadd.f32 %v166, 0.0
  %v171 = vadd.f32 %v167, 0.0
  %v172 = vadd.f32 %v168, 0.0
  %v173 = vadd.f32 %v169, %v170
  %v174 = vadd.f32 %v173, %v171
  %v175 = vadd.f32 %v174, %v172
  %v176 = vld [vmem:[%s3] sm:$0xff]
  %v177 = vadd.f32 %v176, %v175
  %178 = vst [vmem:[%s3] sm:$0xff] %v177
  // Predicated region
  $region18: #{_binary_ce_loss.1} parent=0 // pred_check
    _
  $region19: #{_binary_ce_loss.1} parent=0 // pred_check_branch
    %180 = sbr.rel (0) target = $region21
  $region20: #{_binary_ce_loss.1} parent=0 // pred_region
    _
  $region21: #{_binary_ce_loss.1} parent=0 // pred_fallthru
    _
  // Predicated region
  $region22: #{_binary_ce_loss.1} parent=0 // pred_check
    _
  $region23: #{_binary_ce_loss.1} parent=0 // pred_check_branch
    %182 = sbr.rel (0) target = $region25
  $region24: #{_binary_ce_loss.1} parent=0 // pred_region
    _
  $region25: #{_binary_ce_loss.1} parent=0 // pred_fallthru
    _

</llo_original>
